<compile_context>
chip_gen: v7x
topology: tpu7x:2x2x1
jax: 0.10.0
libtpu: 0.0.40
codegen_flags: <defaults>
</compile_context>

<pallas_src>
import jax
import jax.numpy as jnp
from jax.experimental import pallas as pl
from jax.experimental.pallas import tpu as pltpu


def _where_kernel(cond_ref, x_ref, y_ref, o_ref):
    # Elementwise select on the VPU; cond is a bool tile.
    o_ref[...] = jnp.where(cond_ref[...], x_ref[...], y_ref[...])


_LANE = 512                        # pad-path lane width (multiple of 128)
_MAX_NATIVE_LANE = 8192            # use trailing dim directly as lane if <= this
_TARGET_BLOCK_ELEMS = 2048 * 512   # ~4 MiB per f32 block buffer
_SPLIT_ELEMS = 512 * 1024          # split single-block cases above ~2 MiB/buffer


def _pick_block_rows(rows, lane):
    """Block rows: multiple of 32 (bool tiling) unless covering all rows."""
    target = max(32, (_TARGET_BLOCK_ELEMS // lane) // 32 * 32)
    if rows > target:
        return target
    # Mid-sized tensors: ensure >=2 grid steps so v7x megacore can shard the
    # "parallel" axis; overhead is <~5% of step time on 1-TC chips at this size.
    if rows >= 64 and rows * lane >= _SPLIT_ELEMS:
        half = (((rows + 1) // 2) + 31) // 32 * 32
        if 0 < half < rows:
            return half
    return rows            # single block == full array dims (always legal)


def pallas_where(cond, x, y):
    """Elementwise where(cond, x, y); layout-agnostic, lane-dense tiling."""
    assert cond.shape == x.shape == y.shape, "shapes must match"
    assert x.dtype == y.dtype, "x/y dtypes must match (no implicit promotion)"
    orig_shape = x.shape
    total = x.size
    if cond.dtype != jnp.bool_:
        cond = cond.astype(jnp.bool_)

    last = orig_shape[-1] if x.ndim >= 1 else 1
    if x.ndim >= 2 and last % 128 == 0 and last <= _MAX_NATIVE_LANE:
        # Fast path: trailing dim is lane-dense already -> free reshape, no pad.
        lane = last
        rows = total // lane
        padded = total

        def to2d(a, fill):
            return a.reshape(rows, lane)
    else:
        # Flatten and pad only to the next multiple of _LANE (<= 511 elements).
        lane = _LANE
        padded = pl.cdiv(total, lane) * lane
        rows = padded // lane

        def to2d(a, fill):
            flat = a.reshape(-1)
            if padded != total:
                flat = jnp.pad(flat, (0, padded - total), constant_values=fill)
            return flat.reshape(rows, lane)

    cond2 = to2d(cond, False)   # bool mask passed straight through (1 B/elem)
    x2 = to2d(x, 0)
    y2 = to2d(y, 0)

    block_rows = _pick_block_rows(rows, lane)
    blk = (block_rows, lane)
    idx = lambda i: (i, 0)
    grid = (pl.cdiv(rows, block_rows),)   # ragged final block handled by Pallas

    bytes_accessed = total * (cond2.dtype.itemsize + 3 * x.dtype.itemsize)

    out2 = pl.pallas_call(
        _where_kernel,
        out_shape=jax.ShapeDtypeStruct((rows, lane), x.dtype),
        grid=grid,
        in_specs=[
            pl.BlockSpec(blk, idx),  # cond (bool)
            pl.BlockSpec(blk, idx),  # x
            pl.BlockSpec(blk, idx),  # y
        ],
        out_specs=pl.BlockSpec(blk, idx),
        compiler_params=pltpu.CompilerParams(
            dimension_semantics=("parallel",),
            vmem_limit_bytes=40 * 1024 * 1024,
        ),
        cost_estimate=pl.CostEstimate(
            flops=total, transcendentals=0, bytes_accessed=bytes_accessed),
    )(cond2, x2, y2)

    out_flat = out2.reshape(-1)
    if padded != total:
        out_flat = out_flat[:total]
    return out_flat.reshape(orig_shape)


if __name__ == "__main__":
    key = jax.random.PRNGKey(0)
    k_c, k_x, k_y = jax.random.split(key, 3)

    # Small rank-4 shapes consistent with Where_F32_R4.
    shape = (2, 4, 16, 16)
    cond = jax.random.bernoulli(k_c, p=0.5, shape=shape)          # bool
    x = jax.random.normal(k_x, shape, dtype=jnp.float32)          # f32
    y = jax.random.normal(k_y, shape, dtype=jnp.float32)          # f32

    out = pallas_where(cond, x, y)
    out = jax.block_until_ready(out)

    ref = jnp.where(cond, x, y)
    assert out.shape == ref.shape and out.dtype == ref.dtype
    assert bool(jnp.all(out == ref))

    print("KERNEL_OK")
</pallas_src>

<mosaic_0001>
module attributes {stable_mosaic.version = 11 : i64} {
  func.func @_where_kernel(%arg0: i32, %arg1: memref<4x512xi32, #tpu.memory_space<vmem>>, %arg2: memref<4x512xf32, #tpu.memory_space<vmem>>, %arg3: memref<4x512xf32, #tpu.memory_space<vmem>>, %arg4: memref<4x512xf32, #tpu.memory_space<vmem>>) attributes {dimension_semantics = [#tpu.dimension_semantics<parallel>], iteration_bounds = array<i64: 1>, scalar_prefetch = 0 : i64, scratch_operands = 0 : i64, tpu.core_type = #tpu.core_type<tc>, window_params = [{transform_indices = @transform_0, window_bounds = array<i64: 4, 512>}, {transform_indices = @transform_1, window_bounds = array<i64: 4, 512>}, {transform_indices = @transform_2, window_bounds = array<i64: 4, 512>}, {transform_indices = @transform_3, window_bounds = array<i64: 4, 512>}]} {
    %c0 = arith.constant 0 : index
    %c0_0 = arith.constant 0 : index
    %0 = vector.load %arg1[%c0, %c0_0] : memref<4x512xi32, #tpu.memory_space<vmem>>, vector<4x512xi32>
    %cst = arith.constant dense<0> : vector<4x512xi32>
    %1 = arith.cmpi ne, %0, %cst : vector<4x512xi32>
    %c0_1 = arith.constant 0 : index
    %c0_2 = arith.constant 0 : index
    %2 = vector.load %arg2[%c0_1, %c0_2] : memref<4x512xf32, #tpu.memory_space<vmem>>, vector<4x512xf32>
    %c0_3 = arith.constant 0 : index
    %c0_4 = arith.constant 0 : index
    %3 = vector.load %arg3[%c0_3, %c0_4] : memref<4x512xf32, #tpu.memory_space<vmem>>, vector<4x512xf32>
    %4 = arith.select %1, %2, %3 : vector<4x512xi1>, vector<4x512xf32>
    %c0_5 = arith.constant 0 : index
    %c0_6 = arith.constant 0 : index
    %5 = vector.load %arg4[%c0_5, %c0_6] : memref<4x512xf32, #tpu.memory_space<vmem>>, vector<4x512xf32>
    tpu.vector_store %arg4[%c0_5, %c0_6], %4 {strides = array<i32>} : memref<4x512xf32, #tpu.memory_space<vmem>>, vector<4x512xf32>,
    return
  }
  func.func @transform_0(%arg0: i32) -> (i32, i32) {
    %c0_i32 = arith.constant 0 : i32
    %c0_i32_0 = arith.constant 0 : i32
    return %arg0, %c0_i32 : i32, i32
  }
  func.func @transform_1(%arg0: i32) -> (i32, i32) {
    %c0_i32 = arith.constant 0 : i32
    %c0_i32_0 = arith.constant 0 : i32
    return %arg0, %c0_i32 : i32, i32
  }
  func.func @transform_2(%arg0: i32) -> (i32, i32) {
    %c0_i32 = arith.constant 0 : i32
    %c0_i32_0 = arith.constant 0 : i32
    return %arg0, %c0_i32 : i32, i32
  }
  func.func @transform_3(%arg0: i32) -> (i32, i32) {
    %c0_i32 = arith.constant 0 : i32
    %c0_i32_0 = arith.constant 0 : i32
    return %arg0, %c0_i32 : i32, i32
  }
}

</mosaic_0001>

<llo_original>
// kernel: tpu_custom_call.1
$region0: #{tpu_custom_call.1}
  #allocation0 [shape = 'u32[]', space=smem, size = 0x4, offset = 0x4, fixed_abs, tag = 'smem constant byte address 0x4 - core index']
  #allocation1 [shape = 'u32[144,128]{1,0:T(1,128)}', space=vmem, size = 0x12000, scoped, tag = 'internal scratch']
  %s0 = inlined_call_operand.vmem [shape: s32[4,512], index: 0, kind: input, shape index: {}]
  %s1 = inlined_call_operand.vmem [shape: f32[4,512], index: 1, kind: input, shape index: {}]
  %s2 = inlined_call_operand.hbm [shape: f32[4,512], index: 2, kind: input, shape index: {}]
  %s3 = inlined_call_operand.hbm [shape: f32[4,512], index: 3, kind: output, shape index: {}]
  %s4 = sld [smem:[#allocation0]]
  $region26: #{tpu_custom_call.1} parent=0
    _
  %s6 = ssub.s32 1, %s4
  %s7 = scalar_select 0, %s6, %s4
  $region1: #{tpu_custom_call.1} parent=0
    #allocation2 [shape = 'u8[8192]{0}', space=vmem, size = 0x2000, scoped, tag = 'input window, operand 2, single buffered']
    #allocation3 [shape = 's32[1]{0}', space=sflag, size = 0x4, scoped, tag = 'scoped memory for tpu_custom_call.1']
    #allocation4 [shape = 's32[1]{0}', space=sflag, size = 0x4, scoped, tag = 'scoped memory for tpu_custom_call.1']
    #allocation5 [shape = 'u8[8192]{0}', space=vmem, size = 0x2000, scoped, tag = 'output window, operand 0, single buffered']
    %8 = vsyncpa [#allocation3], 0
    %9 = vsyncpa [#allocation4], 0
    // Predicated region
    $region2: #{tpu_custom_call.1} parent=1 // pred_check
      _
    $region3: #{tpu_custom_call.1} parent=1 // pred_check_branch
      %11 = sbr.rel (0) target = $region5
    $region4: #{tpu_custom_call.1} parent=1 // pred_region
      _
    $region5: #{tpu_custom_call.1} parent=1 // pred_fallthru
      _
    // Predicated region
    $region6: #{tpu_custom_call.1} parent=1 // pred_check
      _
    $region7: #{tpu_custom_call.1} parent=1 // pred_check_branch
      %13 = sbr.rel (0) target = $region9
    $region8: #{tpu_custom_call.1} parent=1 // pred_region
      _
    $region9: #{tpu_custom_call.1} parent=1 // pred_fallthru
      _
    // Predicated region
    $region10: #{tpu_custom_call.1} parent=1 // pred_check
      _
    $region11: #{tpu_custom_call.1} parent=1 // pred_check_branch
      %15 = sbr.rel (0) target = $region13
    $region12: #{tpu_custom_call.1} parent=1 // pred_region
      %s17 = ssub.s32 256, 256
      %18 = vsyncadd [#allocation3], %s17
      %s20 = sshll.u32 [#allocation2], 4
      %s21 = int_to_ptr.vmem [resolvable:$true] %s20
      %23 = dma.hbm_to_vmem [thread:$0]  %s2, 256, %s21, [#allocation3]
    $region13: #{tpu_custom_call.1} parent=1 // pred_fallthru
      _
    // Predicated region
    $region14: #{tpu_custom_call.1} parent=1 // pred_check
      _
    $region15: #{tpu_custom_call.1} parent=1 // pred_check_branch
      %25 = sbr.rel (0) target = $region17
    $region16: #{tpu_custom_call.1} parent=1 // pred_region
      %26 = dma.done [#allocation3], 256
    $region17: #{tpu_custom_call.1} parent=1 // pred_fallthru
      _
    %v27 = vld [vmem:[%s0] sm:$0xff]
    %v28 = vld [vmem:[%s0 + $0x8] sm:$0xff]
    %vm29 = vcmp.ne.s32.totalorder %v27, 0
    %vm30 = vcmp.ne.s32.totalorder %v28, 0
    %v31 = vld [vmem:[%s1] sm:$0xff]
    %v32 = vld [vmem:[%s1 + $0x8] sm:$0xff]
    %v33 = vld [vmem:[#allocation2] sm:$0xff]
    %v34 = vld [vmem:[#allocation2 + $0x8] sm:$0xff]
    %v35 = vsel %vm29, %v31, %v33
    %v36 = vsel %vm30, %v32, %v34
    %37 = vst [vmem:[#allocation5] sm:$0xff] %v35
    %38 = vst [vmem:[#allocation5 + $0x8] sm:$0xff] %v36
    // Predicated region
    $region18: #{tpu_custom_call.1} parent=1 // pred_check
      _
    $region19: #{tpu_custom_call.1} parent=1 // pred_check_branch
      %40 = sbr.rel (0) target = $region21
    $region20: #{tpu_custom_call.1} parent=1 // pred_region
      %s42 = ssub.s32 256, 256
      %43 = vsyncadd [#allocation4], %s42
      %s45 = sshll.u32 [#allocation5], 4
      %s46 = int_to_ptr.vmem [resolvable:$true] %s45
      %48 = dma.vmem_to_hbm [thread:$0]  %s46, 256, %s3, [#allocation4]
    $region21: #{tpu_custom_call.1} parent=1 // pred_fallthru
      _
    // Predicated region
    $region22: #{tpu_custom_call.1} parent=1 // pred_check
      _
    $region23: #{tpu_custom_call.1} parent=1 // pred_check_branch
      %50 = sbr.rel (0) target = $region25
    $region24: #{tpu_custom_call.1} parent=1 // pred_region
      %51 = dma.done [#allocation4], 256
    $region25: #{tpu_custom_call.1} parent=1 // pred_fallthru
      _
    %52 = vsyncpa [#allocation3], 1
    %53 = vsyncpa [#allocation4], 1

</llo_original>
